<compile_context>
chip_gen: v5e
topology: v5e:2x2
jax: 0.10.0
libtpu: 0.0.40
codegen_flags: <defaults>
</compile_context>

<pallas_src>
import numpy as np
import jax
import jax.numpy as jnp
from jax.experimental import pallas as pl
from jax.experimental.pallas import tpu as pltpu


def _vmem_limit_bytes():
    """~3/4 of physical VMEM (96 MiB on v5e/v6e, 48 MiB on v7x), capped at 100 MiB."""
    try:
        cap = getattr(pltpu.get_tpu_info(), "vmem_capacity_bytes", None)
        if cap:
            return int(min(cap * 3 // 4, 100 * 1024 * 1024))
    except Exception:
        pass
    return 64 * 1024 * 1024


def _edge_norm_kernel(idx_ref, featT_ref, out_ref, acc_ref):
    """One (edge-tile, node-chunk) grid step.

    idx_ref   : (1, 2*TILE) i32   [src indices | dst indices] of this edge tile
    featT_ref : (F, CHUNK)  f32   F = 3+2T rows: pos^T ; (onehot@recip_table)^T ; onehot^T
    out_ref   : (1, TILE)   f32   normalized edge lengths (lane-dense)
    acc_ref   : (F, 2*TILE) f32   VMEM accumulator over node chunks
    """
    j = pl.program_id(1)
    chunk = featT_ref.shape[1]
    two_tile = idx_ref.shape[1]
    tile = two_tile // 2
    n_t = (featT_ref.shape[0] - 3) // 2     # number of atom types T

    @pl.when(j == 0)
    def _():
        acc_ref[...] = jnp.zeros_like(acc_ref)

    # Stacked one-hot gather matrix for this node chunk, built on the VPU
    # (never materialized in HBM).
    node_ids = jax.lax.broadcasted_iota(jnp.int32, (chunk, two_tile), 0) + j * chunk
    onehot = (node_ids == idx_ref[...]).astype(jnp.float32)             # (CHUNK, 2*TILE)

    # Single fused gather matmul (MXU): partial contribution of this node chunk.
    acc_ref[...] += jnp.dot(featT_ref[...], onehot,
                            preferred_element_type=jnp.float32)         # (F, 2*TILE)

    @pl.when(j == pl.num_programs(1) - 1)
    def _():
        acc = acc_ref[...]
        src = acc[:, :tile]                                             # (F, TILE)
        dst = acc[:, tile:]                                             # (F, TILE)
        vec = dst[:3, :] - src[:3, :]                                   # (3, TILE)
        r = jnp.sqrt(jnp.sum(vec * vec, axis=0, keepdims=True))         # (1, TILE)
        # recip[e] = sum_b table[t_src, b] * onehot_dst[b] = table[t_src, t_dst]  (exact)
        recip = jnp.sum(src[3:3 + n_t, :] * dst[3 + n_t:, :], axis=0, keepdims=True)
        out_ref[...] = r * recip                                        # (1, TILE)


def edge_length_normalizer(pos, edge_index, atom_types, recip_table, *,
                           tile_edges=1024, max_node_chunk=1024):
    """pos (N,3) f32, edge_index (2,E) i32, atom_types (N,) i32, recip_table (T,T) f32.
    Returns {'norm_length': (E,1) f32, 'edge_type': (2,E) i32}."""
    assert tile_edges % 128 == 0, "tile_edges must be a multiple of 128"
    assert max_node_chunk % 128 == 0, "max_node_chunk must be a multiple of 128"
    N = pos.shape[0]
    E = edge_index.shape[1]
    T = recip_table.shape[0]
    F = 3 + 2 * T

    # --- edge tiling (lane axis) ---
    tile_edges = max(128, min(tile_edges, -(-E // 128) * 128))
    n_tiles = max(1, -(-E // tile_edges))
    E_pad = n_tiles * tile_edges
    pad_e = E_pad - E

    # --- node chunking (contraction axis of the gather matmul) ---
    if N <= max_node_chunk:
        node_chunk, n_chunks, N_pad = N, 1, N
    else:
        node_chunk = max_node_chunk
        n_chunks = -(-N // node_chunk)
        N_pad = n_chunks * node_chunk

    idx = edge_index.astype(jnp.int32)
    if pad_e:
        idx = jnp.pad(idx, ((0, 0), (0, pad_e)))   # pad with node 0; sliced off below
    # Per-tile stacked, lane-dense layout: [src_tile0 | dst_tile0 | src_tile1 | dst_tile1 | ...]
    idx_stack = (idx.reshape(2, n_tiles, tile_edges)
                    .transpose(1, 0, 2)
                    .reshape(1, n_tiles * 2 * tile_edges))

    # Fused node-feature matrix (cheap O(N) wrapper glue).
    pos_f32 = pos.astype(jnp.float32)
    table_f32 = recip_table.astype(jnp.float32)
    ntype_oh = (atom_types.astype(jnp.int32)[:, None]
                == jnp.arange(T, dtype=jnp.int32)[None, :]).astype(jnp.float32)   # (N, T)
    featT = jnp.concatenate([pos_f32, ntype_oh @ table_f32, ntype_oh], axis=1).T  # (F, N)
    if N_pad > N:
        featT = jnp.pad(featT, ((0, 0), (0, N_pad - N)))   # padded nodes are never selected

    feat_bytes = 4 * F * N_pad * (n_tiles if n_chunks > 1 else 1)
    cost = pl.CostEstimate(
        flops=2 * F * N_pad * 2 * E_pad + 8 * E_pad,
        transcendentals=E_pad,
        bytes_accessed=4 * 2 * E_pad + feat_bytes + 4 * E_pad,
    )

    out = pl.pallas_call(
        _edge_norm_kernel,
        out_shape=jax.ShapeDtypeStruct((1, E_pad), jnp.float32),
        grid_spec=pltpu.PrefetchScalarGridSpec(
            num_scalar_prefetch=0,
            grid=(n_tiles, n_chunks),
            in_specs=[
                pl.BlockSpec((1, 2 * tile_edges), lambda i, j: (0, i)),    # stacked edge indices
                pl.BlockSpec((F, node_chunk), lambda i, j: (0, j)),        # fused node features
            ],
            out_specs=pl.BlockSpec((1, tile_edges), lambda i, j: (0, i)),  # lane-dense output
            scratch_shapes=[pltpu.VMEM((F, 2 * tile_edges), jnp.float32)],
        ),
        compiler_params=pltpu.CompilerParams(
            dimension_semantics=("parallel", "arbitrary"),
            vmem_limit_bytes=_vmem_limit_bytes(),
        ),
        cost_estimate=cost,
    )(idx_stack, featT)

    norm_length = out[0, :E][:, None]                                           # (E, 1)
    edge_type = jnp.take(atom_types.astype(jnp.int32),
                         edge_index.reshape(-1)).reshape(2, -1)                 # (2, E)
    return {"norm_length": norm_length, "edge_type": edge_type}


def _build_recip_table(r_max, type_names, per_edge_type_cutoff):
    """numpy equivalent of _process_per_edge_type_cutoff().reciprocal() as a (T,T) table.
    If per_edge_type_cutoff is None, fill with 1/r_max."""
    T = len(type_names)
    if per_edge_type_cutoff is None:
        return np.full((T, T), 1.0 / r_max, dtype=np.float32)
    table = np.full((T, T), r_max, dtype=np.float32)
    for i, s in enumerate(type_names):
        if s in per_edge_type_cutoff:
            e = per_edge_type_cutoff[s]
            if isinstance(e, float):
                table[i, :] = e
            else:
                for j, t in enumerate(type_names):
                    if t in e:
                        table[i, j] = e[t]
    assert np.all(table > 0) and np.all(table <= r_max)
    return (1.0 / table).astype(np.float32)


if __name__ == "__main__":
    key = jax.random.PRNGKey(0)
    k_pos, k_edge, k_type = jax.random.split(key, 3)

    type_names = ["H", "C", "O"]
    r_max = 5.0
    per_edge_type_cutoff = {"H": 2.0, "C": {"H": 4.0, "C": 3.5}, "O": 3.75}
    recip_table = jnp.asarray(_build_recip_table(r_max, type_names, per_edge_type_cutoff))

    def reference(pos, edge_index, atom_types, recip_table):
        vec = pos[edge_index[1]] - pos[edge_index[0]]
        r = jnp.linalg.norm(vec, axis=-1, keepdims=True)
        et = atom_types[edge_index]
        return r * recip_table[et[0], et[1]][:, None]

    # --- small synthetic graph (primary test, single node chunk / single edge tile) ---
    N, E = 8, 16
    pos = jax.random.normal(k_pos, (N, 3), dtype=jnp.float32) * 2.0
    edge_index = jax.random.randint(k_edge, (2, E), 0, N, dtype=jnp.int32)
    atom_types = jax.random.randint(k_type, (N,), 0, len(type_names), dtype=jnp.int32)

    out = edge_length_normalizer(pos, edge_index, atom_types, recip_table)
    norm_length = jax.block_until_ready(out["norm_length"])
    ref = reference(pos, edge_index, atom_types, recip_table)
    np.testing.assert_allclose(np.asarray(norm_length), np.asarray(ref), rtol=1e-5, atol=1e-5)
    assert norm_length.shape == (E, 1)
    assert out["edge_type"].shape == (2, E)

    # --- exercise the node-chunked / multi-edge-tile path (still small shapes) ---
    k_pos2, k_edge2, k_type2 = jax.random.split(jax.random.PRNGKey(0), 3)
    N2, E2 = 300, 500
    pos2 = jax.random.normal(k_pos2, (N2, 3), dtype=jnp.float32) * 3.0
    edge_index2 = jax.random.randint(k_edge2, (2, E2), 0, N2, dtype=jnp.int32)
    atom_types2 = jax.random.randint(k_type2, (N2,), 0, len(type_names), dtype=jnp.int32)

    out2 = edge_length_normalizer(pos2, edge_index2, atom_types2, recip_table,
                                  tile_edges=256, max_node_chunk=128)
    nl2 = jax.block_until_ready(out2["norm_length"])
    ref2 = reference(pos2, edge_index2, atom_types2, recip_table)
    np.testing.assert_allclose(np.asarray(nl2), np.asarray(ref2), rtol=1e-5, atol=1e-5)
    assert nl2.shape == (E2, 1)

    print("KERNEL_OK")
</pallas_src>

<mosaic_0001>
module attributes {stable_mosaic.version = 11 : i64} {
  func.func @_edge_norm_kernel(%arg0: i32, %arg1: i32, %arg2: memref<1x256xi32, #tpu.memory_space<vmem>>, %arg3: memref<9x8xf32, #tpu.memory_space<vmem>>, %arg4: memref<1x128xf32, #tpu.memory_space<vmem>>, %arg5: memref<9x256xf32, #tpu.memory_space<vmem>>) attributes {dimension_semantics = [#tpu.dimension_semantics<parallel>, #tpu.dimension_semantics<arbitrary>], iteration_bounds = array<i64: 1, 1>, scalar_prefetch = 0 : i64, scratch_operands = 1 : i64, tpu.core_type = #tpu.core_type<tc>, window_params = [{transform_indices = @transform_0, window_bounds = array<i64: 1, 256>}, {transform_indices = @transform_1, window_bounds = array<i64: 9, 8>}, {transform_indices = @transform_2, window_bounds = array<i64: 1, 128>}]} {
    %c0_i32 = arith.constant 0 : i32
    %0 = arith.cmpi eq, %arg1, %c0_i32 : i32
    %1 = arith.extui %0 : i1 to i32
    %c0_i32_0 = arith.constant 0 : i32
    %2 = arith.cmpi ne, %1, %c0_i32_0 : i32
    scf.if %2 {
      %cst_10 = arith.constant 0.000000e+00 : f32
      %20 = vector.broadcast %cst_10 : f32 to vector<9x256xf32>
      %c0_11 = arith.constant 0 : index
      %c0_12 = arith.constant 0 : index
      %21 = vector.load %arg5[%c0_11, %c0_12] : memref<9x256xf32, #tpu.memory_space<vmem>>, vector<9x256xf32>
      tpu.vector_store %arg5[%c0_11, %c0_12], %20 {strides = array<i32>} : memref<9x256xf32, #tpu.memory_space<vmem>>, vector<9x256xf32>,
    } else {
    }
    %3 = tpu.iota {dimensions = array<i32: 0>} : vector<8x256xi32>
    %c8_i32 = arith.constant 8 : i32
    %4 = arith.muli %arg1, %c8_i32 : i32
    %5 = vector.broadcast %4 : i32 to vector<8x256xi32>
    %6 = arith.addi %3, %5 : vector<8x256xi32>
    %c0 = arith.constant 0 : index
    %c0_1 = arith.constant 0 : index
    %7 = vector.load %arg2[%c0, %c0_1] : memref<1x256xi32, #tpu.memory_space<vmem>>, vector<1x256xi32>
    %8 = vector.broadcast %7 : vector<1x256xi32> to vector<8x256xi32>
    %9 = arith.cmpi eq, %6, %8 : vector<8x256xi32>
    %10 = arith.extui %9 : vector<8x256xi1> to vector<8x256xi32>
    %11 = arith.sitofp %10 : vector<8x256xi32> to vector<8x256xf32>
    %c0_2 = arith.constant 0 : index
    %c0_3 = arith.constant 0 : index
    %12 = vector.load %arg5[%c0_2, %c0_3] : memref<9x256xf32, #tpu.memory_space<vmem>>, vector<9x256xf32>
    %c0_4 = arith.constant 0 : index
    %c0_5 = arith.constant 0 : index
    %13 = vector.load %arg3[%c0_4, %c0_5] : memref<9x8xf32, #tpu.memory_space<vmem>>, vector<9x8xf32>
    %cst = arith.constant dense<0.000000e+00> : vector<9x256xf32>
    %14 = tpu.matmul %13, %11, %cst {dimension_numbers = #tpu.dot_dimension_numbers<[1], [0], [0], [1], [0, 0, 1, 1], [], []>} : vector<9x8xf32>, vector<8x256xf32>, vector<9x256xf32> -> vector<9x256xf32>
    %15 = arith.addf %12, %14 : vector<9x256xf32>
    %c0_6 = arith.constant 0 : index
    %c0_7 = arith.constant 0 : index
    %16 = vector.load %arg5[%c0_6, %c0_7] : memref<9x256xf32, #tpu.memory_space<vmem>>, vector<9x256xf32>
    tpu.vector_store %arg5[%c0_6, %c0_7], %15 {strides = array<i32>} : memref<9x256xf32, #tpu.memory_space<vmem>>, vector<9x256xf32>,
    %c0_i32_8 = arith.constant 0 : i32
    %17 = arith.cmpi eq, %arg1, %c0_i32_8 : i32
    %18 = arith.extui %17 : i1 to i32
    %c0_i32_9 = arith.constant 0 : i32
    %19 = arith.cmpi ne, %18, %c0_i32_9 : i32
    scf.if %19 {
      %c0_10 = arith.constant 0 : index
      %c0_11 = arith.constant 0 : index
      %20 = vector.load %arg5[%c0_10, %c0_11] : memref<9x256xf32, #tpu.memory_space<vmem>>, vector<9x256xf32>
      %21 = vector.extract_strided_slice %20 {offsets = [0, 0], sizes = [9, 128], strides = [1, 1]} : vector<9x256xf32> to vector<9x128xf32>
      %22 = vector.extract_strided_slice %20 {offsets = [0, 128], sizes = [9, 128], strides = [1, 1]} : vector<9x256xf32> to vector<9x128xf32>
      %23 = vector.extract_strided_slice %22 {offsets = [0, 0], sizes = [3, 128], strides = [1, 1]} : vector<9x128xf32> to vector<3x128xf32>
      %24 = vector.extract_strided_slice %21 {offsets = [0, 0], sizes = [3, 128], strides = [1, 1]} : vector<9x128xf32> to vector<3x128xf32>
      %25 = arith.subf %23, %24 : vector<3x128xf32>
      %26 = arith.mulf %25, %25 : vector<3x128xf32>
      %cst_12 = arith.constant dense<0.000000e+00> : vector<128xf32>
      %27 = vector.multi_reduction <add>, %26, %cst_12 [0] : vector<3x128xf32> to vector<128xf32>
      %28 = vector.shape_cast %27 : vector<128xf32> to vector<1x128xf32>
      %29 = math.sqrt %28 : vector<1x128xf32>
      %30 = vector.extract_strided_slice %21 {offsets = [3, 0], sizes = [3, 128], strides = [1, 1]} : vector<9x128xf32> to vector<3x128xf32>
      %31 = vector.extract_strided_slice %22 {offsets = [6, 0], sizes = [3, 128], strides = [1, 1]} : vector<9x128xf32> to vector<3x128xf32>
      %32 = arith.mulf %30, %31 : vector<3x128xf32>
      %cst_13 = arith.constant dense<0.000000e+00> : vector<128xf32>
      %33 = vector.multi_reduction <add>, %32, %cst_13 [0] : vector<3x128xf32> to vector<128xf32>
      %34 = vector.shape_cast %33 : vector<128xf32> to vector<1x128xf32>
      %35 = arith.mulf %29, %34 : vector<1x128xf32>
      %c0_14 = arith.constant 0 : index
      %c0_15 = arith.constant 0 : index
      %36 = vector.load %arg4[%c0_14, %c0_15] : memref<1x128xf32, #tpu.memory_space<vmem>>, vector<1x128xf32>
      tpu.vector_store %arg4[%c0_14, %c0_15], %35 {strides = array<i32>} : memref<1x128xf32, #tpu.memory_space<vmem>>, vector<1x128xf32>,
    } else {
    }
    return
  }
  func.func @transform_0(%arg0: i32, %arg1: i32) -> (i32, i32) {
    %c0_i32 = arith.constant 0 : i32
    %c0_i32_0 = arith.constant 0 : i32
    return %c0_i32, %arg0 : i32, i32
  }
  func.func @transform_1(%arg0: i32, %arg1: i32) -> (i32, i32) {
    %c0_i32 = arith.constant 0 : i32
    %c0_i32_0 = arith.constant 0 : i32
    return %c0_i32, %arg1 : i32, i32
  }
  func.func @transform_2(%arg0: i32, %arg1: i32) -> (i32, i32) {
    %c0_i32 = arith.constant 0 : i32
    %c0_i32_0 = arith.constant 0 : i32
    return %c0_i32, %arg0 : i32, i32
  }
}

</mosaic_0001>

<llo_original>
// kernel: tpu_custom_call.1
$region0: #{tpu_custom_call.1}
  #allocation0 [shape = 'u32[]', space=smem, size = 0x4, offset = 0x4, fixed_abs, tag = 'smem constant byte address 0x4 - core index']
  #allocation1 [shape = 'u32[72,128]{1,0:T(1,128)}', space=vmem, size = 0x9000, scoped, tag = 'internal scratch']
  #allocation2 [shape = 'f32[9,256]{1,0:T(8,128)}', space=vmem, size = 0x4000, scoped, tag = 'scratch operand']
  %s0 = inlined_call_operand.vmem [shape: s32[1,256], index: 0, kind: input, shape index: {}]
  %s1 = inlined_call_operand.vmem [shape: f32[9,8], index: 1, kind: input, shape index: {}]
  %s2 = inlined_call_operand.hbm [shape: f32[1,128], index: 2, kind: output, shape index: {}]
  %s3 = sld [smem:[#allocation0]]
  $region26: #{tpu_custom_call.1} parent=0
    _
  %s5 = ssub.s32 1, %s3
  %s6 = scalar_select 0, %s5, %s3
  $region1: #{tpu_custom_call.1} parent=0
    #allocation3 [shape = 'u8[512]{0}', space=vmem, size = 0x400, scoped, tag = 'output window, operand 0, single buffered']
    #allocation4 [shape = 's32[1]{0}', space=sflag, size = 0x4, scoped, tag = 'scoped memory for tpu_custom_call.1']
    %7 = vsyncpa [#allocation4], 0
    // Predicated region
    $region2: #{tpu_custom_call.1} parent=1 // pred_check
      _
    $region3: #{tpu_custom_call.1} parent=1 // pred_check_branch
      %9 = sbr.rel (0) target = $region5
    $region4: #{tpu_custom_call.1} parent=1 // pred_region
      _
    $region5: #{tpu_custom_call.1} parent=1 // pred_fallthru
      _
    // Predicated region
    $region6: #{tpu_custom_call.1} parent=1 // pred_check
      _
    $region7: #{tpu_custom_call.1} parent=1 // pred_check_branch
      %11 = sbr.rel (0) target = $region9
    $region8: #{tpu_custom_call.1} parent=1 // pred_region
      _
    $region9: #{tpu_custom_call.1} parent=1 // pred_fallthru
      _
    %p12 = scmp.eq.s32.totalorder 0, 0
    // Predicated region
    $region10: #{tpu_custom_call.1} parent=1 // pred_check
      %p13 = pneg %p12
    $region11: #{tpu_custom_call.1} parent=1 // pred_check_branch
      %15 = sbr.rel (%p13) target = $region13
    $region12: #{tpu_custom_call.1} parent=1 // pred_region
      %16 = vst [vmem:[#allocation2] sm:$0xff] 0.0
      %17 = vst [vmem:[#allocation2 + $0x8] sm:$0xff] 0.0
      %18 = vst [vmem:[#allocation2 + $0x10] sm:$0x1] 0.0
      %19 = vst [vmem:[#allocation2 + $0x18] sm:$0x1] 0.0
    $region13: #{tpu_custom_call.1} parent=1 // pred_fallthru
      _
    %v20 = vlaneseq
    %v21 = vshrl.u32 %v20, 7
    %s22 = smul.u32 0, 8
    %v23 = vstv %s22
    %v24 = vadd.s32 %v21, %v23
    %v25 = vld [vmem:[%s0] sm:$0x3]
    %v26 = vperm.slane %v25, 0
    %v27 = vperm.slane %v25, 1
    %vm28 = vcmp.eq.s32.totalorder %v24, %v26
    %vm29 = vcmp.eq.s32.totalorder %v24, %v27
    %v30 = vsel %vm28, 1, 0
    %v31 = vsel %vm29, 1, 0
    %v32 = vcvt.s32.f32 %v30
    %v33 = vcvt.s32.f32 %v31
    %v34 = vld [vmem:[#allocation2] sm:$0xff]
    %v35 = vld [vmem:[#allocation2 + $0x8] sm:$0xff]
    %v36 = vld [vmem:[#allocation2 + $0x10] sm:$0x1]
    %v37 = vld [vmem:[#allocation2 + $0x18] sm:$0x1]
    %v38 = vld [vmem:[%s1] sm:$0xff]
    %v39 = vld [vmem:[%s1 + $0x8] sm:$0x1]
    %vm40 = vcmask 64512
    %v42 = vsel %vm40, %v38, 0
    %v45 = vsel %vm40, %v39, 0
    %47 = vmatpush.msra.mxu0 0.0
    %48 = vmatpush.msra.mxu0 0.0
    %49 = vmatpush.msra.mxu0 0.0
    %50 = vmatpush.msra.mxu0 0.0
    %51 = vmatpush.msra.mxu0 0.0
    %52 = vmatpush.msra.mxu0 0.0
    %53 = vmatpush.msra.mxu0 0.0
    %54 = vmatpush.msra.mxu0 0.0
    %55 = vmatpush.msra.mxu0 0.0
    %56 = vmatpush.msra.mxu0 0.0
    %57 = vmatpush.msra.mxu0 0.0
    %58 = vmatpush.msra.mxu0 0.0
    %59 = vmatpush.msra.mxu0 0.0
    %60 = vmatpush.msra.mxu0 0.0
    %61 = vmatpush.msra.mxu0 0.0
    %62 = vmatpush.msra.mxu0 %v32
    %63 = vmatmul.f32.gmra.mxu0 %v42
    %v64 = vpop.f32.mrf.mxu0
    %v65 = vadd.f32 0.0, %v64
    %66 = vmatmul.f32.gmra.mxu0 %v45
    %v67 = vpop.f32.mrf.mxu0
    %v68 = vadd.f32 0.0, %v67
    %69 = vdwg.mxu0
    %70 = vmatpush.msra.mxu0 0.0
    %71 = vmatpush.msra.mxu0 0.0
    %72 = vmatpush.msra.mxu0 0.0
    %73 = vmatpush.msra.mxu0 0.0
    %74 = vmatpush.msra.mxu0 0.0
    %75 = vmatpush.msra.mxu0 0.0
    %76 = vmatpush.msra.mxu0 0.0
    %77 = vmatpush.msra.mxu0 0.0
    %78 = vmatpush.msra.mxu0 0.0
    %79 = vmatpush.msra.mxu0 0.0
    %80 = vmatpush.msra.mxu0 0.0
    %81 = vmatpush.msra.mxu0 0.0
    %82 = vmatpush.msra.mxu0 0.0
    %83 = vmatpush.msra.mxu0 0.0
    %84 = vmatpush.msra.mxu0 0.0
    %85 = vmatpush.msra.mxu0 %v33
    %86 = vmatmul.f32.gmra.mxu0 %v42
    %v87 = vpop.f32.mrf.mxu0
    %v88 = vadd.f32 0.0, %v87
    %89 = vmatmul.f32.gmra.mxu0 %v45
    %v90 = vpop.f32.mrf.mxu0
    %v91 = vadd.f32 0.0, %v90
    %92 = vdwg.mxu0
    %v93 = vadd.f32 %v34, %v65
    %v94 = vadd.f32 %v35, %v88
    %v95 = vadd.f32 %v36, %v68
    %v96 = vadd.f32 %v37, %v91
    %97 = vst [vmem:[#allocation2] sm:$0xff] %v93
    %98 = vst [vmem:[#allocation2 + $0x8] sm:$0xff] %v94
    %99 = vst [vmem:[#allocation2 + $0x10] sm:$0x1] %v95
    %100 = vst [vmem:[#allocation2 + $0x18] sm:$0x1] %v96
    // Predicated region
    $region14: #{tpu_custom_call.1} parent=1 // pred_check
      %p101 = pneg %p12
    $region15: #{tpu_custom_call.1} parent=1 // pred_check_branch
      %103 = sbr.rel (%p101) target = $region17
    $region16: #{tpu_custom_call.1} parent=1 // pred_region
      %v104 = vld [vmem:[#allocation2] sm:$0xff]
      %v105 = vld [vmem:[#allocation2 + $0x8] sm:$0xff]
      %v106 = vld [vmem:[#allocation2 + $0x18] sm:$0x1]
      %v107 = vsub.f32 %v105, %v104
      %v108 = vmul.f32 %v107, %v107
      %vm109 = vcmask 1042432
      %v110 = vsel %vm109, %v108, 0.0
      %v111 = vrot.slane %v110, 4
      %v112 = vadd.f32 %v110, %v111
      %v113 = vrot.slane %v112, 2
      %v114 = vadd.f32 %v112, %v113
      %v115 = vrot.slane %v114, 1
      %v116 = vadd.f32 %v114, %v115
      %v117 = vrsqrt.pop %v116
      %v118 = vmul.f32 %v117, %v116
      %v119 = vmul.f32 %v118, %v117
      %v120 = vmul.f32 0.5, %v119
      %v121 = vsub.f32 1.5, %v120
      %v122 = vmul.f32 %v117, %v121
      %v123 = vmul.f32 %v116, %v122
      %vm124 = vcmp.eq.f32.partialorder %v116, inf
      %v125 = vsel %vm124, %v116, %v123
      %vm126 = vcmp.eq.f32.partialorder %v116, 0.0
      %v127 = vand.u32 %v116, 2147483648
      %v128 = vsel %vm126, %v127, %v125
      %vm131 = vcmask 1044480
      %v132 = vrot.slane %v105, 3
      %v133 = vrot.slane %v106, 3
      %v134 = vsel %vm131, %v132, %v133
      %v136 = vmul.f32 %v104, %v134
      %v138 = vrot.slane %v136, 3
      %v140 = vsel %vm109, %v138, 0.0
      %v141 = vrot.slane %v140, 4
      %v142 = vadd.f32 %v140, %v141
      %v143 = vrot.slane %v142, 2
      %v144 = vadd.f32 %v142, %v143
      %v145 = vrot.slane %v144, 1
      %v146 = vadd.f32 %v144, %v145
      %v147 = vmul.f32 %v128, %v146
      %148 = vst [vmem:[#allocation3] sm:$0x1] %v147
    $region17: #{tpu_custom_call.1} parent=1 // pred_fallthru
      _
    // Predicated region
    $region18: #{tpu_custom_call.1} parent=1 // pred_check
      _
    $region19: #{tpu_custom_call.1} parent=1 // pred_check_branch
      %150 = sbr.rel (0) target = $region21
    $region20: #{tpu_custom_call.1} parent=1 // pred_region
      %152 = vsyncadd [#allocation4], 0
      %s154 = sshll.u32 [#allocation3], 4
      %s155 = int_to_ptr.vmem [resolvable:$true] %s154
      %s156 = sshll.u32 %s2, 4
      %s157 = int_to_ptr.hbm [resolvable:$true] %s156
      %159 = dma.vmem_to_hbm [thread:$0]  %s155, 16, %s157, [#allocation4]
    $region21: #{tpu_custom_call.1} parent=1 // pred_fallthru
      _
    // Predicated region
    $region22: #{tpu_custom_call.1} parent=1 // pred_check
      _
    $region23: #{tpu_custom_call.1} parent=1 // pred_check_branch
      %161 = sbr.rel (0) target = $region25
    $region24: #{tpu_custom_call.1} parent=1 // pred_region
      %163 = dma.done [#allocation4], 16
    $region25: #{tpu_custom_call.1} parent=1 // pred_fallthru
      _
    %164 = vsyncpa [#allocation4], 1

</llo_original>
